<compile_context>
chip_gen: v7x
topology: tpu7x:2x2x1
jax: 0.10.0
libtpu: 0.0.40
codegen_flags: <defaults>
</compile_context>

<pallas_src>
import functools

import jax
import jax.numpy as jnp
from jax import lax
from jax.experimental import pallas as pl
from jax.experimental.pallas import tpu as pltpu


def _round_up(x, m):
    return ((x + m - 1) // m) * m


# ----------------------------------------------------------------------------
# "word_representer": deterministically-initialized parameters producing the
# dynamic weight matrix var of shape (V, H).  (Synthetic stand-in for the
# external word_representer module; its only contract is returning (V, H).)
# ----------------------------------------------------------------------------
def make_word_representer_params(key, vocab, rep_dim, hidden):
    k1, k2, k3 = jax.random.split(key, 3)
    emb = jax.random.normal(k1, (vocab, rep_dim), dtype=jnp.float32) * 0.1
    proj = jax.random.normal(k2, (rep_dim, hidden), dtype=jnp.float32) * 0.1
    bias = jax.random.normal(k3, (hidden,), dtype=jnp.float32) * 0.01
    return emb, proj, bias


def word_representer(params):
    emb, proj, bias = params
    # (V, rep_dim) @ (rep_dim, H) + (H,) -> (V, H)
    return jnp.tanh(emb @ proj + bias)


# ----------------------------------------------------------------------------
# Pallas kernel: out[i, j] tile = sum_k  x[i, k] tile  ·  w[j, k] tile^T
# (contraction on last dims — no in-kernel transpose, f32 accumulator scratch)
# ----------------------------------------------------------------------------
def _varlinear_kernel(x_ref, w_ref, o_ref, acc_ref):
    # x_ref: (tm, tk), w_ref: (tn, tk), o_ref: (tm, tn), acc_ref: (tm, tn) f32

    @pl.when(pl.program_id(2) == 0)
    def _():
        acc_ref[...] = jnp.zeros_like(acc_ref)

    acc_ref[...] += lax.dot_general(
        x_ref[...],
        w_ref[...],
        dimension_numbers=(((1,), (1,)), ((), ())),  # contract last dim of both
        preferred_element_type=jnp.float32,
    )

    @pl.when(pl.program_id(2) == pl.num_programs(2) - 1)
    def _():
        o_ref[...] = acc_ref[...].astype(o_ref.dtype)


@functools.partial(
    jax.jit, static_argnames=("tm", "tn", "tk", "compute_dtype")
)
def var_linear(data, var, *, tm=256, tn=256, tk=512, compute_dtype=jnp.bfloat16):
    """data: (..., H), var: (V, H) -> (..., V), computed as data @ var.T."""
    assert data.ndim > 1, "data should be at least 2 dimensional"
    assert data.shape[-1] == var.shape[-1]

    H = data.shape[-1]
    V = var.shape[0]
    lead_shape = data.shape[:-1]
    out_dtype = data.dtype

    x2d = data.reshape(-1, H)
    N = x2d.shape[0]

    # Tile sizes, clamped to the (padded) problem so tiny shapes don't over-pad.
    tm_eff = min(tm, _round_up(N, 8))          # row tile (sublane-aligned)
    tn_eff = min(tn, _round_up(V, 128))        # vocab tile (lane-dense output)
    tk_eff = H if H <= tk else tk              # full-H block or tk-chunked K

    n_pad = _round_up(N, tm_eff)
    v_pad = _round_up(V, tn_eff)
    h_pad = H if tk_eff == H else _round_up(H, tk_eff)

    # bf16 streams, f32 accumulation inside the kernel.
    x2d = x2d.astype(compute_dtype)
    w = var.astype(compute_dtype)
    if n_pad != N or h_pad != H:
        x2d = jnp.pad(x2d, ((0, n_pad - N), (0, h_pad - H)))
    if v_pad != V or h_pad != H:
        w = jnp.pad(w, ((0, v_pad - V), (0, h_pad - H)))

    grid = (n_pad // tm_eff, v_pad // tn_eff, h_pad // tk_eff)

    cost = pl.CostEstimate(
        flops=2 * n_pad * v_pad * h_pad,
        transcendentals=0,
        bytes_accessed=(
            x2d.size * x2d.dtype.itemsize
            + w.size * w.dtype.itemsize
            + n_pad * v_pad * jnp.dtype(out_dtype).itemsize
        ),
    )

    out2d = pl.pallas_call(
        _varlinear_kernel,
        out_shape=jax.ShapeDtypeStruct((n_pad, v_pad), out_dtype),
        grid_spec=pltpu.PrefetchScalarGridSpec(
            num_scalar_prefetch=0,
            grid=grid,
            in_specs=[
                pl.BlockSpec((tm_eff, tk_eff), lambda i, j, k: (i, k)),  # data rows
                pl.BlockSpec((tn_eff, tk_eff), lambda i, j, k: (j, k)),  # weight rows
            ],
            out_specs=pl.BlockSpec((tm_eff, tn_eff), lambda i, j, k: (i, j)),
            scratch_shapes=[pltpu.VMEM((tm_eff, tn_eff), jnp.float32)],
        ),
        compiler_params=pltpu.CompilerParams(
            dimension_semantics=("parallel", "parallel", "arbitrary"),
        ),
        cost_estimate=cost,
    )(x2d, w)

    return out2d[:N, :V].reshape(*lead_shape, V)


if __name__ == "__main__":
    key = jax.random.PRNGKey(0)
    k_data, k_params = jax.random.split(key)

    # Small shapes consistent with a seq-model logits projection:
    batch, seq, hidden, vocab, rep_dim = 2, 8, 32, 16, 24

    data = jax.random.normal(k_data, (batch, seq, hidden), dtype=jnp.float32)
    params = make_word_representer_params(k_params, vocab, rep_dim, hidden)
    var = word_representer(params)          # (vocab, hidden)

    out = var_linear(data, var)             # (batch, seq, vocab)
    out = jax.block_until_ready(out)

    # Reference check (plain JAX, f32). Kernel streams bf16 / accumulates f32,
    # so allow bf16-level tolerance.
    ref = jnp.matmul(data, var.T)
    assert out.shape == (batch, seq, vocab)
    assert jnp.allclose(out, ref, atol=2e-2, rtol=2e-2)

    print("KERNEL_OK")
</pallas_src>

<mosaic_0001>
module attributes {stable_mosaic.version = 11 : i64} {
  func.func @_varlinear_kernel(%arg0: i32, %arg1: i32, %arg2: i32, %arg3: memref<16x32xbf16, #tpu.memory_space<vmem>>, %arg4: memref<128x32xbf16, #tpu.memory_space<vmem>>, %arg5: memref<16x128xf32, #tpu.memory_space<vmem>>, %arg6: memref<16x128xf32, #tpu.memory_space<vmem>>) attributes {dimension_semantics = [#tpu.dimension_semantics<parallel>, #tpu.dimension_semantics<parallel>, #tpu.dimension_semantics<arbitrary>], iteration_bounds = array<i64: 1, 1, 1>, scalar_prefetch = 0 : i64, scratch_operands = 1 : i64, tpu.core_type = #tpu.core_type<tc>, window_params = [{transform_indices = @transform_0, window_bounds = array<i64: 16, 32>}, {transform_indices = @transform_1, window_bounds = array<i64: 128, 32>}, {transform_indices = @transform_2, window_bounds = array<i64: 16, 128>}]} {
    %c0_i32 = arith.constant 0 : i32
    %0 = arith.cmpi eq, %arg2, %c0_i32 : i32
    %1 = arith.extui %0 : i1 to i32
    %c0_i32_0 = arith.constant 0 : i32
    %2 = arith.cmpi ne, %1, %c0_i32_0 : i32
    scf.if %2 {
      %cst_10 = arith.constant 0.000000e+00 : f32
      %12 = vector.broadcast %cst_10 : f32 to vector<16x128xf32>
      %c0_11 = arith.constant 0 : index
      %c0_12 = arith.constant 0 : index
      %13 = vector.load %arg6[%c0_11, %c0_12] : memref<16x128xf32, #tpu.memory_space<vmem>>, vector<16x128xf32>
      tpu.vector_store %arg6[%c0_11, %c0_12], %12 {strides = array<i32>} : memref<16x128xf32, #tpu.memory_space<vmem>>, vector<16x128xf32>,
    } else {
    }
    %c0 = arith.constant 0 : index
    %c0_1 = arith.constant 0 : index
    %3 = vector.load %arg6[%c0, %c0_1] : memref<16x128xf32, #tpu.memory_space<vmem>>, vector<16x128xf32>
    %c0_2 = arith.constant 0 : index
    %c0_3 = arith.constant 0 : index
    %4 = vector.load %arg3[%c0_2, %c0_3] : memref<16x32xbf16, #tpu.memory_space<vmem>>, vector<16x32xbf16>
    %c0_4 = arith.constant 0 : index
    %c0_5 = arith.constant 0 : index
    %5 = vector.load %arg4[%c0_4, %c0_5] : memref<128x32xbf16, #tpu.memory_space<vmem>>, vector<128x32xbf16>
    %cst = arith.constant dense<0.000000e+00> : vector<16x128xf32>
    %6 = tpu.matmul %4, %5, %cst {dimension_numbers = #tpu.dot_dimension_numbers<[1], [1], [0], [0], [0, 0, 1, 0], [], []>} : vector<16x32xbf16>, vector<128x32xbf16>, vector<16x128xf32> -> vector<16x128xf32>
    %7 = arith.addf %3, %6 : vector<16x128xf32>
    %c0_6 = arith.constant 0 : index
    %c0_7 = arith.constant 0 : index
    %8 = vector.load %arg6[%c0_6, %c0_7] : memref<16x128xf32, #tpu.memory_space<vmem>>, vector<16x128xf32>
    tpu.vector_store %arg6[%c0_6, %c0_7], %7 {strides = array<i32>} : memref<16x128xf32, #tpu.memory_space<vmem>>, vector<16x128xf32>,
    %c0_i32_8 = arith.constant 0 : i32
    %9 = arith.cmpi eq, %arg2, %c0_i32_8 : i32
    %10 = arith.extui %9 : i1 to i32
    %c0_i32_9 = arith.constant 0 : i32
    %11 = arith.cmpi ne, %10, %c0_i32_9 : i32
    scf.if %11 {
      %c0_10 = arith.constant 0 : index
      %c0_11 = arith.constant 0 : index
      %12 = vector.load %arg6[%c0_10, %c0_11] : memref<16x128xf32, #tpu.memory_space<vmem>>, vector<16x128xf32>
      %c0_12 = arith.constant 0 : index
      %c0_13 = arith.constant 0 : index
      %13 = vector.load %arg5[%c0_12, %c0_13] : memref<16x128xf32, #tpu.memory_space<vmem>>, vector<16x128xf32>
      tpu.vector_store %arg5[%c0_12, %c0_13], %12 {strides = array<i32>} : memref<16x128xf32, #tpu.memory_space<vmem>>, vector<16x128xf32>,
    } else {
    }
    return
  }
  func.func @transform_0(%arg0: i32, %arg1: i32, %arg2: i32) -> (i32, i32) {
    %c0_i32 = arith.constant 0 : i32
    return %arg0, %arg2 : i32, i32
  }
  func.func @transform_1(%arg0: i32, %arg1: i32, %arg2: i32) -> (i32, i32) {
    %c0_i32 = arith.constant 0 : i32
    return %arg1, %arg2 : i32, i32
  }
  func.func @transform_2(%arg0: i32, %arg1: i32, %arg2: i32) -> (i32, i32) {
    %c0_i32 = arith.constant 0 : i32
    return %arg0, %arg1 : i32, i32
  }
}

</mosaic_0001>

<llo_original>
// kernel: var_linear.1
$region0: #{var_linear.1}
  #allocation0 [shape = 'u32[]', space=smem, size = 0x4, offset = 0x4, fixed_abs, tag = 'smem constant byte address 0x4 - core index']
  #allocation1 [shape = 'u32[144,128]{1,0:T(1,128)}', space=vmem, size = 0x12000, scoped, tag = 'internal scratch']
  #allocation2 [shape = 'f32[16,128]{1,0:T(8,128)}', space=vmem, size = 0x2000, scoped, tag = 'scratch operand']
  %s0 = inlined_call_operand.vmem [shape: bf16[16,32], index: 0, kind: input, shape index: {}]
  %s1 = inlined_call_operand.vmem [shape: bf16[128,32], index: 1, kind: input, shape index: {}]
  %s2 = inlined_call_operand.vmem [shape: f32[16,128], index: 2, kind: output, shape index: {}]
  %s3 = sld [smem:[#allocation0]]
  $region26: #{var_linear.1} parent=0
    _
  %s5 = ssub.s32 1, %s3
  %s6 = scalar_select 0, %s5, %s3
  // Predicated region
  $region2: #{var_linear.1} parent=0 // pred_check
    _
  $region3: #{var_linear.1} parent=0 // pred_check_branch
    %8 = sbr.rel (0) target = $region5
  $region4: #{var_linear.1} parent=0 // pred_region
    _
  $region5: #{var_linear.1} parent=0 // pred_fallthru
    _
  // Predicated region
  $region6: #{var_linear.1} parent=0 // pred_check
    _
  $region7: #{var_linear.1} parent=0 // pred_check_branch
    %10 = sbr.rel (0) target = $region9
  $region8: #{var_linear.1} parent=0 // pred_region
    _
  $region9: #{var_linear.1} parent=0 // pred_fallthru
    _
  %p12 = scmp.eq.s32.totalorder 0, 0
  // Predicated region
  $region10: #{var_linear.1} parent=0 // pred_check
    %p13 = pneg %p12
  $region11: #{var_linear.1} parent=0 // pred_check_branch
    %15 = sbr.rel (%p13) target = $region13
  $region12: #{var_linear.1} parent=0 // pred_region
    %16 = vst [vmem:[#allocation2] sm:$0xff] 0.0
    %17 = vst [vmem:[#allocation2 + $0x8] sm:$0xff] 0.0
  $region13: #{var_linear.1} parent=0 // pred_fallthru
    _
  %v18 = vld [vmem:[#allocation2] sm:$0xff]
  %v19 = vld [vmem:[#allocation2 + $0x8] sm:$0xff]
  %v20 = vld [vmem:[%s0] sm:$0xf]
  %v21 = vld [vmem:[%s0 + $0x4] sm:$0xf]
  %v22 = vld [vmem:[%s1] sm:$0xf]
  %v23 = vld [vmem:[%s1 + $0x4] sm:$0xf]
  %v24 = vld [vmem:[%s1 + $0x8] sm:$0xf]
  %v25 = vld [vmem:[%s1 + $0xc] sm:$0xf]
  %v26 = vld [vmem:[%s1 + $0x10] sm:$0xf]
  %v27 = vld [vmem:[%s1 + $0x14] sm:$0xf]
  %v28 = vld [vmem:[%s1 + $0x18] sm:$0xf]
  %v29 = vld [vmem:[%s1 + $0x1c] sm:$0xf]
  %v30 = vld [vmem:[%s1 + $0x20] sm:$0xf]
  %v31 = vld [vmem:[%s1 + $0x24] sm:$0xf]
  %v32 = vld [vmem:[%s1 + $0x28] sm:$0xf]
  %v33 = vld [vmem:[%s1 + $0x2c] sm:$0xf]
  %v34 = vld [vmem:[%s1 + $0x30] sm:$0xf]
  %v35 = vld [vmem:[%s1 + $0x34] sm:$0xf]
  %v36 = vld [vmem:[%s1 + $0x38] sm:$0xf]
  %v37 = vld [vmem:[%s1 + $0x3c] sm:$0xf]
  %v40 = vunpack.c.l.b16 %v20
  %v41 = vunpack.c.l.b16 %v21
  %v42 = vpack.c.b16 %v41, %v40
  %v59 = vunpack.c.l.b16 %v22
  %v60 = vunpack.c.l.b16 %v23
  %v61 = vunpack.c.l.b16 %v24
  %v62 = vunpack.c.l.b16 %v25
  %v63 = vunpack.c.l.b16 %v26
  %v64 = vunpack.c.l.b16 %v27
  %v65 = vunpack.c.l.b16 %v28
  %v66 = vunpack.c.l.b16 %v29
  %v67 = vunpack.c.l.b16 %v30
  %v68 = vunpack.c.l.b16 %v31
  %v69 = vunpack.c.l.b16 %v32
  %v70 = vunpack.c.l.b16 %v33
  %v71 = vunpack.c.l.b16 %v34
  %v72 = vunpack.c.l.b16 %v35
  %v73 = vunpack.c.l.b16 %v36
  %v74 = vunpack.c.l.b16 %v37
  %v75 = vpack.c.b16 %v60, %v59
  %v76 = vpack.c.b16 %v62, %v61
  %v77 = vpack.c.b16 %v64, %v63
  %v78 = vpack.c.b16 %v66, %v65
  %v79 = vpack.c.b16 %v68, %v67
  %v80 = vpack.c.b16 %v70, %v69
  %v81 = vpack.c.b16 %v72, %v71
  %v82 = vpack.c.b16 %v74, %v73
  %vm83 = vcmask 261120
  %v85 = vsel %vm83, %v42, 0
  %v88 = vsel %vm83, %v75, 0
  %v91 = vsel %vm83, %v76, 0
  %v94 = vsel %vm83, %v77, 0
  %v97 = vsel %vm83, %v78, 0
  %v100 = vsel %vm83, %v79, 0
  %v103 = vsel %vm83, %v80, 0
  %v106 = vsel %vm83, %v81, 0
  %v109 = vsel %vm83, %v82, 0
  %111 = vmatprep.subr.bf16.mxu0 0
  %112 = vmatpush1.bf16.xpose.msra.mxu0 %v88
  %113 = vmatprep.subr.bf16.mxu0 0
  %114 = vmatpush1.bf16.xpose.msra.mxu0 %v91
  %115 = vmatprep.subr.bf16.mxu0 0
  %116 = vmatpush1.bf16.xpose.msra.mxu0 %v94
  %117 = vmatprep.subr.bf16.mxu0 0
  %118 = vmatpush1.bf16.xpose.msra.mxu0 %v97
  %119 = vmatprep.subr.bf16.mxu0 0
  %120 = vmatpush1.bf16.xpose.msra.mxu0 %v100
  %121 = vmatprep.subr.bf16.mxu0 0
  %122 = vmatpush1.bf16.xpose.msra.mxu0 %v103
  %123 = vmatprep.subr.bf16.mxu0 0
  %124 = vmatpush1.bf16.xpose.msra.mxu0 %v106
  %125 = vmatprep.subr.bf16.mxu0 0
  %126 = vmatpush1.bf16.xpose.msra.mxu0 %v109
  %127 = vmatprep.subr.bf16.mxu0 0
  %128 = vmatpush1.bf16.xpose.msra.mxu0 0
  %129 = vmatprep.subr.bf16.mxu0 0
  %130 = vmatpush1.bf16.xpose.msra.mxu0 0
  %131 = vmatprep.subr.bf16.mxu0 0
  %132 = vmatpush1.bf16.xpose.msra.mxu0 0
  %133 = vmatprep.subr.bf16.mxu0 0
  %134 = vmatpush1.bf16.xpose.msra.mxu0 0
  %135 = vmatprep.subr.bf16.mxu0 0
  %136 = vmatpush1.bf16.xpose.msra.mxu0 0
  %137 = vmatprep.subr.bf16.mxu0 0
  %138 = vmatpush1.bf16.xpose.msra.mxu0 0
  %139 = vmatprep.subr.bf16.mxu0 0
  %140 = vmatpush1.bf16.xpose.msra.mxu0 0
  %141 = vmatprep.subr.bf16.mxu0 0
  %142 = vmatpush1.bf16.xpose.msra.mxu0 0
  %143 = vmatprep.mubr.bf16.mxu0 0
  %144 = vmatmul.mubr.bf16.gmra.mrb[0].mxu0 %v85
  %v145 = vpop.f32.mrb[0].mxu0
  %v146 = vadd.f32 0.0, %v145
  %v147 = vpop.f32.mrb[0].mxu0
  %v148 = vpop.f32.mrb[0].mxu0
  %v149 = vadd.f32 0.0, %v148
  %v150 = vpop.f32.mrb[0].mxu0
  %151 = vdwg.mxu0
  %v152 = vadd.f32 %v18, %v146
  %v153 = vadd.f32 %v19, %v149
  %154 = vst [vmem:[#allocation2] sm:$0xff] %v152
  %155 = vst [vmem:[#allocation2 + $0x8] sm:$0xff] %v153
  // Predicated region
  $region14: #{var_linear.1} parent=0 // pred_check
    %p156 = pneg %p12
  $region15: #{var_linear.1} parent=0 // pred_check_branch
    %158 = sbr.rel (%p156) target = $region17
  $region16: #{var_linear.1} parent=0 // pred_region
    %v159 = vld [vmem:[#allocation2] sm:$0xff]
    %v160 = vld [vmem:[#allocation2 + $0x8] sm:$0xff]
    %161 = vst [vmem:[%s2] sm:$0xff] %v159
    %162 = vst [vmem:[%s2 + $0x8] sm:$0xff] %v160
  $region17: #{var_linear.1} parent=0 // pred_fallthru
    _
  // Predicated region
  $region18: #{var_linear.1} parent=0 // pred_check
    _
  $region19: #{var_linear.1} parent=0 // pred_check_branch
    %164 = sbr.rel (0) target = $region21
  $region20: #{var_linear.1} parent=0 // pred_region
    _
  $region21: #{var_linear.1} parent=0 // pred_fallthru
    _
  // Predicated region
  $region22: #{var_linear.1} parent=0 // pred_check
    _
  $region23: #{var_linear.1} parent=0 // pred_check_branch
    %166 = sbr.rel (0) target = $region25
  $region24: #{var_linear.1} parent=0 // pred_region
    _
  $region25: #{var_linear.1} parent=0 // pred_fallthru
    _

</llo_original>
